<compile_context>
chip_gen: v6e
topology: v6e:2x2x1
jax: 0.10.0
libtpu: 0.0.40
codegen_flags: <defaults>
</compile_context>

<pallas_src>
import functools

import jax
import jax.numpy as jnp
from jax.experimental import pallas as pl
from jax.experimental.pallas import tpu as pltpu


def _round_up(x, m):
    return ((x + m - 1) // m) * m


def _fused_mlp_select_kernel(x_ref, laac_ref, netmap_ref, w1_ref, b1_ref,
                             w2_ref, b2_ref, o_ref, *, n_nets):
    """One row-tile: fused 2-layer MLP for ALL nets + in-kernel laac selection."""
    # Layer 1, all nets fused along lanes: (T, S) @ (S, L*H1) -> f32 accumulate.
    h = jnp.dot(x_ref[...], w1_ref[...], preferred_element_type=jnp.float32)
    h = jnp.maximum(h + b1_ref[...], 0.0)                       # (T, L*H1) f32

    # Per-row net selection BEFORE layer 2: zero every hidden block except the
    # row's laac net. The stacked layer-2 matmul then yields exactly the
    # selected net's output (inactive blocks contribute zero).
    laac = laac_ref[...]                                        # (T, 1) int32
    h = jnp.where(netmap_ref[...] == laac, h, 0.0)              # (T, L*H1)

    # Layer 2, nets stacked along the contraction axis: (T, L*H1) @ (L*H1, H2p).
    y = jnp.dot(h.astype(w2_ref.dtype), w2_ref[...],
                preferred_element_type=jnp.float32)             # (T, H2p)

    # Bias of the selected net (tiny static where-chain; VPU has slack).
    b2 = b2_ref[...]                                            # (L, H2p) f32
    bias = jnp.zeros(y.shape, jnp.float32)
    for l in range(n_nets):
        bias = jnp.where(laac == l, b2[l:l + 1, :], bias)
    o_ref[...] = y + bias


def multi_agent_fc_forward(inputs_list, laac_indices, params,
                           *, tile_rows=512, compute_dtype=jnp.bfloat16):
    """inputs_list: list of A arrays (B, S); laac_indices: (B, A) int32."""
    w1, b1, w2, b2 = params                 # (L,S,H1), (L,H1), (L,H1,H2), (L,H2)
    x = jnp.stack(inputs_list)              # (A, B, S)
    A, B, S = x.shape
    L, _, H1 = w1.shape
    H2 = w2.shape[2]
    N = A * B

    # ---- weight layout ------------------------------------------------------
    H2p = _round_up(H2, 128)                # lane-dense output (unmasked stores)
    # Layer-1 weights of all nets fused along the lane axis: column l*H1 + j.
    w1f = jnp.transpose(w1, (1, 0, 2)).reshape(S, L * H1).astype(compute_dtype)
    b1f = b1.reshape(1, L * H1).astype(jnp.float32)
    # Layer-2 weights stacked along the contraction axis: row l*H1 + j.
    w2s = jnp.pad(w2, ((0, 0), (0, 0), (0, H2p - H2))).reshape(L * H1, H2p)
    w2s = w2s.astype(compute_dtype)
    b2p = jnp.pad(b2, ((0, 0), (0, H2p - H2))).astype(jnp.float32)    # (L, H2p)
    # lane -> net-id map for the in-kernel hidden-block mask.
    net_map = (jnp.arange(L * H1, dtype=jnp.int32) // H1).reshape(1, L * H1)

    # ---- rows: flatten (agent, batch); pad to a multiple of the row tile -----
    tile = min(tile_rows, _round_up(N, 16))          # 16: bf16 sublane packing
    Np = _round_up(N, tile)
    x_flat = jnp.pad(x.reshape(N, S).astype(compute_dtype), ((0, Np - N), (0, 0)))
    # gather index for row (a, b) is laac_indices[b, a]
    laac_flat = jnp.pad(laac_indices.T.reshape(N, 1).astype(jnp.int32),
                        ((0, Np - N), (0, 0)))

    kernel = functools.partial(_fused_mlp_select_kernel, n_nets=L)

    out = pl.pallas_call(
        kernel,
        out_shape=jax.ShapeDtypeStruct((Np, H2p), jnp.float32),
        grid=(Np // tile,),
        in_specs=[
            pl.BlockSpec((tile, S), lambda i: (i, 0)),            # x rows
            pl.BlockSpec((tile, 1), lambda i: (i, 0)),            # laac per row
            pl.BlockSpec((1, L * H1), lambda i: (0, 0)),          # lane->net map
            pl.BlockSpec((S, L * H1), lambda i: (0, 0)),          # fused W1
            pl.BlockSpec((1, L * H1), lambda i: (0, 0)),          # fused b1
            pl.BlockSpec((L * H1, H2p), lambda i: (0, 0)),        # stacked W2
            pl.BlockSpec((L, H2p), lambda i: (0, 0)),             # per-net b2
        ],
        out_specs=pl.BlockSpec((tile, H2p), lambda i: (i, 0)),
        compiler_params=pltpu.CompilerParams(
            dimension_semantics=("parallel",)),                   # megacore on v7x
    )(x_flat, laac_flat, net_map, w1f, b1f, w2s, b2p)

    out = out[:N, :H2].reshape(A, B, H2)
    return [out[a] for a in range(A)]


def _reference(inputs_list, laac_indices, params):
    """Pure-JAX f32 reference of the torch forward()."""
    w1, b1, w2, b2 = params
    x = jnp.stack(inputs_list)                                     # (A, B, S)
    A = x.shape[0]
    h = jnp.maximum(jnp.einsum("abs,lsh->labh", x, w1)
                    + b1[:, None, None, :], 0.0)                   # (L, A, B, H1)
    y = jnp.einsum("labh,lho->labo", h, w2) + b2[:, None, None, :] # (L, A, B, O)
    idx = laac_indices.T[None, :, :, None]                         # (1, A, B, 1)
    g = jnp.take_along_axis(y, idx, axis=0)[0]                     # (A, B, O)
    return [g[a] for a in range(A)]


def init_params(key, n_nets, in_size, idims):
    """idims = [H1, H2]: Linear(S,H1) -> ReLU -> Linear(H1,H2), per net."""
    H1, H2 = idims

    def nrm(k, shape, scale=0.1):
        return scale * jax.random.normal(k, shape, dtype=jnp.float32)

    w1, b1, w2, b2 = [], [], [], []
    for l in range(n_nets):
        k1, k2, k3, k4 = jax.random.split(jax.random.fold_in(key, l), 4)
        w1.append(nrm(k1, (in_size, H1)))
        b1.append(nrm(k2, (H1,)))
        w2.append(nrm(k3, (H1, H2)))
        b2.append(nrm(k4, (H2,)))
    return (jnp.stack(w1), jnp.stack(b1), jnp.stack(w2), jnp.stack(b2))


if __name__ == "__main__":
    key = jax.random.PRNGKey(0)

    # L independent nets == A agents (as in the module), batch B, obs size S,
    # idims=[32, 32] (hidden 32, output 32).
    L = A = 3
    B, S = 8, 16
    idims = [32, 32]

    k_in, k_laac, k_par = jax.random.split(key, 3)
    inputs_list = [jax.random.normal(jax.random.fold_in(k_in, a), (B, S),
                                     dtype=jnp.float32) for a in range(A)]
    laac_indices = jax.random.randint(k_laac, (B, A), 0, L, dtype=jnp.int32)
    params = init_params(k_par, L, S, idims)

    outs = multi_agent_fc_forward(inputs_list, laac_indices, params)
    outs = [jax.block_until_ready(o) for o in outs]

    refs = _reference(inputs_list, laac_indices, params)
    for o, r in zip(outs, refs):
        assert o.shape == (B, idims[-1])
        # bf16 matmul operands vs f32 reference -> modest tolerance
        assert jnp.allclose(o, r, atol=3e-2, rtol=3e-2), "mismatch vs reference"

    print("KERNEL_OK")
</pallas_src>

<mosaic_0001>
module attributes {stable_mosaic.version = 11 : i64} {
  func.func @_fused_mlp_select_kernel(%arg0: i32, %arg1: memref<32x16xbf16, #tpu.memory_space<vmem>>, %arg2: memref<32x1xi32, #tpu.memory_space<vmem>>, %arg3: memref<1x96xi32, #tpu.memory_space<vmem>>, %arg4: memref<16x96xbf16, #tpu.memory_space<vmem>>, %arg5: memref<1x96xf32, #tpu.memory_space<vmem>>, %arg6: memref<96x128xbf16, #tpu.memory_space<vmem>>, %arg7: memref<3x128xf32, #tpu.memory_space<vmem>>, %arg8: memref<32x128xf32, #tpu.memory_space<vmem>>) attributes {dimension_semantics = [#tpu.dimension_semantics<parallel>], iteration_bounds = array<i64: 1>, scalar_prefetch = 0 : i64, scratch_operands = 0 : i64, tpu.core_type = #tpu.core_type<tc>, window_params = [{transform_indices = @transform_0, window_bounds = array<i64: 32, 16>}, {transform_indices = @transform_1, window_bounds = array<i64: 32, 1>}, {pipeline_mode = #tpu.pipeline_mode<synchronous>, transform_indices = @transform_2, window_bounds = array<i64: 1, 96>}, {pipeline_mode = #tpu.pipeline_mode<synchronous>, transform_indices = @transform_3, window_bounds = array<i64: 16, 96>}, {pipeline_mode = #tpu.pipeline_mode<synchronous>, transform_indices = @transform_4, window_bounds = array<i64: 1, 96>}, {pipeline_mode = #tpu.pipeline_mode<synchronous>, transform_indices = @transform_5, window_bounds = array<i64: 96, 128>}, {pipeline_mode = #tpu.pipeline_mode<synchronous>, transform_indices = @transform_6, window_bounds = array<i64: 3, 128>}, {transform_indices = @transform_7, window_bounds = array<i64: 32, 128>}]} {
    %c0 = arith.constant 0 : index
    %c0_0 = arith.constant 0 : index
    %0 = vector.load %arg1[%c0, %c0_0] : memref<32x16xbf16, #tpu.memory_space<vmem>>, vector<32x16xbf16>
    %c0_1 = arith.constant 0 : index
    %c0_2 = arith.constant 0 : index
    %1 = vector.load %arg4[%c0_1, %c0_2] : memref<16x96xbf16, #tpu.memory_space<vmem>>, vector<16x96xbf16>
    %cst = arith.constant dense<0.000000e+00> : vector<32x96xf32>
    %2 = tpu.matmul %0, %1, %cst {dimension_numbers = #tpu.dot_dimension_numbers<[1], [0], [0], [1], [0, 0, 1, 1], [], []>} : vector<32x16xbf16>, vector<16x96xbf16>, vector<32x96xf32> -> vector<32x96xf32>
    %c0_3 = arith.constant 0 : index
    %c0_4 = arith.constant 0 : index
    %3 = vector.load %arg5[%c0_3, %c0_4] : memref<1x96xf32, #tpu.memory_space<vmem>>, vector<1x96xf32>
    %4 = vector.broadcast %3 : vector<1x96xf32> to vector<32x96xf32>
    %5 = arith.addf %2, %4 : vector<32x96xf32>
    %cst_5 = arith.constant 0.000000e+00 : f32
    %6 = vector.broadcast %cst_5 : f32 to vector<32x96xf32>
    %7 = arith.maximumf %5, %6 : vector<32x96xf32>
    %c0_6 = arith.constant 0 : index
    %c0_7 = arith.constant 0 : index
    %8 = vector.load %arg2[%c0_6, %c0_7] : memref<32x1xi32, #tpu.memory_space<vmem>>, vector<32x1xi32>
    %c0_8 = arith.constant 0 : index
    %c0_9 = arith.constant 0 : index
    %9 = vector.load %arg3[%c0_8, %c0_9] : memref<1x96xi32, #tpu.memory_space<vmem>>, vector<1x96xi32>
    %10 = vector.broadcast %9 : vector<1x96xi32> to vector<32x96xi32>
    %11 = vector.broadcast %8 : vector<32x1xi32> to vector<32x96xi32>
    %12 = arith.cmpi eq, %10, %11 : vector<32x96xi32>
    %cst_10 = arith.constant 0.000000e+00 : f32
    %13 = vector.broadcast %cst_10 : f32 to vector<32x96xf32>
    %14 = arith.select %12, %7, %13 : vector<32x96xi1>, vector<32x96xf32>
    %15 = arith.truncf %14 : vector<32x96xf32> to vector<32x96xbf16>
    %c0_11 = arith.constant 0 : index
    %c0_12 = arith.constant 0 : index
    %16 = vector.load %arg6[%c0_11, %c0_12] : memref<96x128xbf16, #tpu.memory_space<vmem>>, vector<96x128xbf16>
    %cst_13 = arith.constant dense<0.000000e+00> : vector<32x128xf32>
    %17 = tpu.matmul %15, %16, %cst_13 {dimension_numbers = #tpu.dot_dimension_numbers<[1], [0], [0], [1], [0, 0, 1, 1], [], []>} : vector<32x96xbf16>, vector<96x128xbf16>, vector<32x128xf32> -> vector<32x128xf32>
    %c0_14 = arith.constant 0 : index
    %c0_15 = arith.constant 0 : index
    %18 = vector.load %arg7[%c0_14, %c0_15] : memref<3x128xf32, #tpu.memory_space<vmem>>, vector<3x128xf32>
    %cst_16 = arith.constant 0.000000e+00 : f32
    %19 = vector.broadcast %cst_16 : f32 to vector<32x128xf32>
    %c0_i32 = arith.constant 0 : i32
    %20 = vector.broadcast %c0_i32 : i32 to vector<32x1xi32>
    %21 = arith.cmpi eq, %8, %20 : vector<32x1xi32>
    %22 = vector.extract_strided_slice %18 {offsets = [0, 0], sizes = [1, 128], strides = [1, 1]} : vector<3x128xf32> to vector<1x128xf32>
    %23 = vector.shape_cast %21 : vector<32x1xi1> to vector<32x1xi1>
    %24 = vector.broadcast %23 : vector<32x1xi1> to vector<32x128xi1>
    %25 = vector.shape_cast %22 : vector<1x128xf32> to vector<1x128xf32>
    %26 = vector.broadcast %25 : vector<1x128xf32> to vector<32x128xf32>
    %27 = arith.select %24, %26, %19 : vector<32x128xi1>, vector<32x128xf32>
    %c1_i32 = arith.constant 1 : i32
    %28 = vector.broadcast %c1_i32 : i32 to vector<32x1xi32>
    %29 = arith.cmpi eq, %8, %28 : vector<32x1xi32>
    %30 = vector.extract_strided_slice %18 {offsets = [1, 0], sizes = [1, 128], strides = [1, 1]} : vector<3x128xf32> to vector<1x128xf32>
    %31 = vector.shape_cast %29 : vector<32x1xi1> to vector<32x1xi1>
    %32 = vector.broadcast %31 : vector<32x1xi1> to vector<32x128xi1>
    %33 = vector.shape_cast %30 : vector<1x128xf32> to vector<1x128xf32>
    %34 = vector.broadcast %33 : vector<1x128xf32> to vector<32x128xf32>
    %35 = arith.select %32, %34, %27 : vector<32x128xi1>, vector<32x128xf32>
    %c2_i32 = arith.constant 2 : i32
    %36 = vector.broadcast %c2_i32 : i32 to vector<32x1xi32>
    %37 = arith.cmpi eq, %8, %36 : vector<32x1xi32>
    %38 = vector.extract_strided_slice %18 {offsets = [2, 0], sizes = [1, 128], strides = [1, 1]} : vector<3x128xf32> to vector<1x128xf32>
    %39 = vector.shape_cast %37 : vector<32x1xi1> to vector<32x1xi1>
    %40 = vector.broadcast %39 : vector<32x1xi1> to vector<32x128xi1>
    %41 = vector.shape_cast %38 : vector<1x128xf32> to vector<1x128xf32>
    %42 = vector.broadcast %41 : vector<1x128xf32> to vector<32x128xf32>
    %43 = arith.select %40, %42, %35 : vector<32x128xi1>, vector<32x128xf32>
    %44 = arith.addf %17, %43 : vector<32x128xf32>
    %c0_17 = arith.constant 0 : index
    %c0_18 = arith.constant 0 : index
    %45 = vector.load %arg8[%c0_17, %c0_18] : memref<32x128xf32, #tpu.memory_space<vmem>>, vector<32x128xf32>
    tpu.vector_store %arg8[%c0_17, %c0_18], %44 {strides = array<i32>} : memref<32x128xf32, #tpu.memory_space<vmem>>, vector<32x128xf32>,
    return
  }
  func.func @transform_0(%arg0: i32) -> (i32, i32) {
    %c0_i32 = arith.constant 0 : i32
    %c0_i32_0 = arith.constant 0 : i32
    return %arg0, %c0_i32 : i32, i32
  }
  func.func @transform_1(%arg0: i32) -> (i32, i32) {
    %c0_i32 = arith.constant 0 : i32
    %c0_i32_0 = arith.constant 0 : i32
    return %arg0, %c0_i32 : i32, i32
  }
  func.func @transform_2(%arg0: i32) -> (i32, i32) {
    %c0_i32 = arith.constant 0 : i32
    %c0_i32_0 = arith.constant 0 : i32
    %c0_i32_1 = arith.constant 0 : i32
    return %c0_i32, %c0_i32_0 : i32, i32
  }
  func.func @transform_3(%arg0: i32) -> (i32, i32) {
    %c0_i32 = arith.constant 0 : i32
    %c0_i32_0 = arith.constant 0 : i32
    %c0_i32_1 = arith.constant 0 : i32
    return %c0_i32, %c0_i32_0 : i32, i32
  }
  func.func @transform_4(%arg0: i32) -> (i32, i32) {
    %c0_i32 = arith.constant 0 : i32
    %c0_i32_0 = arith.constant 0 : i32
    %c0_i32_1 = arith.constant 0 : i32
    return %c0_i32, %c0_i32_0 : i32, i32
  }
  func.func @transform_5(%arg0: i32) -> (i32, i32) {
    %c0_i32 = arith.constant 0 : i32
    %c0_i32_0 = arith.constant 0 : i32
    %c0_i32_1 = arith.constant 0 : i32
    return %c0_i32, %c0_i32_0 : i32, i32
  }
  func.func @transform_6(%arg0: i32) -> (i32, i32) {
    %c0_i32 = arith.constant 0 : i32
    %c0_i32_0 = arith.constant 0 : i32
    %c0_i32_1 = arith.constant 0 : i32
    return %c0_i32, %c0_i32_0 : i32, i32
  }
  func.func @transform_7(%arg0: i32) -> (i32, i32) {
    %c0_i32 = arith.constant 0 : i32
    %c0_i32_0 = arith.constant 0 : i32
    return %arg0, %c0_i32 : i32, i32
  }
}

</mosaic_0001>

<llo_original>
// kernel: tpu_custom_call.1
$region0: #{tpu_custom_call.1}
  #allocation0 [shape = 'u32[]', space=smem, size = 0x4, offset = 0x4, fixed_abs, tag = 'smem constant byte address 0x4 - core index']
  #allocation1 [shape = 'u32[144,128]{1,0:T(1,128)}', space=vmem, size = 0x12000, scoped, tag = 'internal scratch']
  %s0 = inlined_call_operand.vmem [shape: bf16[32,16], index: 0, kind: input, shape index: {}]
  %s1 = inlined_call_operand.vmem [shape: s32[32,1], index: 1, kind: input, shape index: {}]
  %s2 = inlined_call_operand.vmem [shape: s32[1,96], index: 2, kind: input, shape index: {}]
  %s3 = inlined_call_operand.vmem [shape: bf16[16,96], index: 3, kind: input, shape index: {}]
  %s4 = inlined_call_operand.vmem [shape: f32[1,96], index: 4, kind: input, shape index: {}]
  %s5 = inlined_call_operand.vmem [shape: bf16[96,128], index: 5, kind: input, shape index: {}]
  %s6 = inlined_call_operand.vmem [shape: f32[3,128], index: 6, kind: input, shape index: {}]
  %s7 = inlined_call_operand.hbm [shape: f32[32,128], index: 7, kind: output, shape index: {}]
  %s8 = sld [smem:[#allocation0]]
  $region38: #{tpu_custom_call.1} parent=0
    _
  %s10 = ssub.s32 1, %s8
  %s11 = scalar_select 0, %s10, %s8
  $region1: #{tpu_custom_call.1} parent=0
    #allocation2 [shape = 'u8[16384]{0}', space=vmem, size = 0x4000, scoped, tag = 'output window, operand 0, single buffered']
    #allocation3 [shape = 's32[1]{0}', space=sflag, size = 0x4, scoped, tag = 'scoped memory for tpu_custom_call.1']
    %12 = vsyncpa [#allocation3], 0
    // Predicated region
    $region2: #{tpu_custom_call.1} parent=1 // pred_check
      _
    $region3: #{tpu_custom_call.1} parent=1 // pred_check_branch
      %14 = sbr.rel (0) target = $region5
    $region4: #{tpu_custom_call.1} parent=1 // pred_region
      _
    $region5: #{tpu_custom_call.1} parent=1 // pred_fallthru
      _
    // Predicated region
    $region6: #{tpu_custom_call.1} parent=1 // pred_check
      _
    $region7: #{tpu_custom_call.1} parent=1 // pred_check_branch
      %16 = sbr.rel (0) target = $region9
    $region8: #{tpu_custom_call.1} parent=1 // pred_region
      _
    $region9: #{tpu_custom_call.1} parent=1 // pred_fallthru
      _
    // Predicated region
    $region10: #{tpu_custom_call.1} parent=1 // pred_check
      _
    $region11: #{tpu_custom_call.1} parent=1 // pred_check_branch
      %18 = sbr.rel (0) target = $region13
    $region12: #{tpu_custom_call.1} parent=1 // pred_region
      _
    $region13: #{tpu_custom_call.1} parent=1 // pred_fallthru
      _
    // Predicated region
    $region14: #{tpu_custom_call.1} parent=1 // pred_check
      _
    $region15: #{tpu_custom_call.1} parent=1 // pred_check_branch
      %20 = sbr.rel (0) target = $region17
    $region16: #{tpu_custom_call.1} parent=1 // pred_region
      _
    $region17: #{tpu_custom_call.1} parent=1 // pred_fallthru
      _
    // Predicated region
    $region18: #{tpu_custom_call.1} parent=1 // pred_check
      _
    $region19: #{tpu_custom_call.1} parent=1 // pred_check_branch
      %22 = sbr.rel (0) target = $region21
    $region20: #{tpu_custom_call.1} parent=1 // pred_region
      _
    $region21: #{tpu_custom_call.1} parent=1 // pred_fallthru
      _
    // Predicated region
    $region22: #{tpu_custom_call.1} parent=1 // pred_check
      _
    $region23: #{tpu_custom_call.1} parent=1 // pred_check_branch
      %24 = sbr.rel (0) target = $region25
    $region24: #{tpu_custom_call.1} parent=1 // pred_region
      _
    $region25: #{tpu_custom_call.1} parent=1 // pred_fallthru
      _
    // Predicated region
    $region26: #{tpu_custom_call.1} parent=1 // pred_check
      _
    $region27: #{tpu_custom_call.1} parent=1 // pred_check_branch
      %26 = sbr.rel (0) target = $region29
    $region28: #{tpu_custom_call.1} parent=1 // pred_region
      _
    $region29: #{tpu_custom_call.1} parent=1 // pred_fallthru
      _
    %v28 = vld [vmem:[%s0] sm:$0xf]
    %v29 = vld [vmem:[%s0 + $0x4] sm:$0xf]
    %v30 = vld [vmem:[%s0 + $0x8] sm:$0xf]
    %v31 = vld [vmem:[%s0 + $0xc] sm:$0xf]
    %v32 = vld [vmem:[%s3] sm:$0xf]
    %v33 = vld [vmem:[%s3 + $0x4] sm:$0xf]
    %v34 = vld [vmem:[%s4] sm:$0x1]
    %v36 = vlaneseq
    %v37 = vshrl.u32 %v36, 7
    %v38 = vsub.s32 0, %v37
    %v39 = vrot.slane %v34, %v38
    %v45 = vunpack.c.l.b16 %v28
    %v46 = vunpack.c.l.b16 %v29
    %v47 = vunpack.c.l.b16 %v30
    %v48 = vunpack.c.l.b16 %v31
    %v49 = vpack.c.b16 %v46, %v45
    %v50 = vpack.c.b16 %v48, %v47
    %v53 = vunpack.c.l.b16 %v32
    %v54 = vunpack.c.l.b16 %v33
    %v55 = vpack.c.b16 %v54, %v53
    %vm57 = vcmask 130048
    %v59 = vsel %vm57, %v49, 0
    %v62 = vsel %vm57, %v50, 0
    %64 = vmatprep.subr.bf16.mxu0 0
    %65 = vmatpush1.bf16.msra.mxu0 0
    %66 = vmatprep.subr.bf16.mxu0 0
    %67 = vmatpush1.bf16.msra.mxu0 0
    %68 = vmatprep.subr.bf16.mxu0 0
    %69 = vmatpush1.bf16.msra.mxu0 0
    %70 = vmatprep.subr.bf16.mxu0 0
    %71 = vmatpush1.bf16.msra.mxu0 0
    %72 = vmatprep.subr.bf16.mxu0 0
    %73 = vmatpush1.bf16.msra.mxu0 0
    %74 = vmatprep.subr.bf16.mxu0 0
    %75 = vmatpush1.bf16.msra.mxu0 0
    %76 = vmatprep.subr.bf16.mxu0 0
    %77 = vmatpush1.bf16.msra.mxu0 0
    %78 = vmatprep.subr.bf16.mxu0 0
    %79 = vmatpush1.bf16.msra.mxu0 %v55
    %80 = vmatprep.subr.bf16.mxu0 0
    %81 = vmatpush2.bf16.msra.mxu0 0
    %82 = vmatprep.subr.bf16.mxu0 0
    %83 = vmatpush2.bf16.msra.mxu0 0
    %84 = vmatprep.subr.bf16.mxu0 0
    %85 = vmatpush2.bf16.msra.mxu0 0
    %86 = vmatprep.subr.bf16.mxu0 0
    %87 = vmatpush2.bf16.msra.mxu0 0
    %88 = vmatprep.subr.bf16.mxu0 0
    %89 = vmatpush2.bf16.msra.mxu0 0
    %90 = vmatprep.subr.bf16.mxu0 0
    %91 = vmatpush2.bf16.msra.mxu0 0
    %92 = vmatprep.subr.bf16.mxu0 0
    %93 = vmatpush2.bf16.msra.mxu0 0
    %94 = vmatprep.subr.bf16.mxu0 0
    %95 = vmatpush2.bf16.msra.mxu0 0
    %96 = vmatprep.mubr.bf16.mxu0 0
    %97 = vmatmul.mubr.bf16.gmra.mxu0 %v59
    %v98 = vpop.f32.mrf.mxu0
    %v99 = vadd.f32 %v39, %v98
    %v100 = vpop.f32.mrf.mxu0
    %v101 = vpop.f32.mrf.mxu0
    %v102 = vadd.f32 %v39, %v101
    %v103 = vpop.f32.mrf.mxu0
    %104 = vmatprep.mubr.bf16.mxu0 0
    %105 = vmatmul.mubr.bf16.gmra.mxu0 %v62
    %v106 = vpop.f32.mrf.mxu0
    %v107 = vadd.f32 %v39, %v106
    %v108 = vpop.f32.mrf.mxu0
    %v109 = vpop.f32.mrf.mxu0
    %v110 = vadd.f32 %v39, %v109
    %v111 = vpop.f32.mrf.mxu0
    %112 = vdwg.mxu0
    %v113 = vmax.f32 %v99, 0.0
    %v114 = vmax.f32 %v102, 0.0
    %v115 = vmax.f32 %v107, 0.0
    %v116 = vmax.f32 %v110, 0.0
    %v117 = vld [vmem:[%s1] sm:$0xff]
    %v118 = vld [vmem:[%s1 + $0x8] sm:$0xff]
    %v119 = vld [vmem:[%s1 + $0x10] sm:$0xff]
    %v120 = vld [vmem:[%s1 + $0x18] sm:$0xff]
    %v121 = vld [vmem:[%s2] sm:$0x1]
    %v122 = vlaneseq
    %v123 = vshrl.u32 %v122, 7
    %v124 = vsub.s32 0, %v123
    %v125 = vrot.slane %v121, %v124
    %126 = vset.pattern.permute.xlu0 0
    %127 = vperm.xlu0 %126, %v117
    %v128 = vpop.permute.xlu0 %127
    %129 = vset.pattern.permute.xlu0 0
    %130 = vperm.xlu0 %129, %v118
    %v131 = vpop.permute.xlu0 %130
    %132 = vset.pattern.permute.xlu0 0
    %133 = vperm.xlu0 %132, %v119
    %v134 = vpop.permute.xlu0 %133
    %135 = vset.pattern.permute.xlu0 0
    %136 = vperm.xlu0 %135, %v120
    %v137 = vpop.permute.xlu0 %136
    %vm138 = vcmp.eq.s32.totalorder %v125, %v128
    %vm139 = vcmp.eq.s32.totalorder %v125, %v131
    %vm140 = vcmp.eq.s32.totalorder %v125, %v134
    %vm141 = vcmp.eq.s32.totalorder %v125, %v137
    %v142 = vsel %vm138, %v113, 0.0
    %v143 = vsel %vm139, %v114, 0.0
    %v144 = vsel %vm140, %v115, 0.0
    %v145 = vsel %vm141, %v116, 0.0
    %v146 = vpack.c.bf16 %v143, %v142
    %v147 = vpack.c.bf16 %v145, %v144
    %v148 = vld [vmem:[%s5] sm:$0xf]
    %v149 = vld [vmem:[%s5 + $0x4] sm:$0xf]
    %v150 = vld [vmem:[%s5 + $0x8] sm:$0xf]
    %v151 = vld [vmem:[%s5 + $0xc] sm:$0xf]
    %v152 = vld [vmem:[%s5 + $0x10] sm:$0xf]
    %v153 = vld [vmem:[%s5 + $0x14] sm:$0xf]
    %v154 = vld [vmem:[%s5 + $0x18] sm:$0xf]
    %v155 = vld [vmem:[%s5 + $0x1c] sm:$0xf]
    %v156 = vld [vmem:[%s5 + $0x20] sm:$0xf]
    %v157 = vld [vmem:[%s5 + $0x24] sm:$0xf]
    %v158 = vld [vmem:[%s5 + $0x28] sm:$0xf]
    %v159 = vld [vmem:[%s5 + $0x2c] sm:$0xf]
    %v160 = vld [vmem:[%s6] sm:$0x7]
    %vm161 = vcmp.eq.s32.totalorder %v117, 0
    %vm162 = vcmp.eq.s32.totalorder %v118, 0
    %vm163 = vcmp.eq.s32.totalorder %v119, 0
    %vm164 = vcmp.eq.s32.totalorder %v120, 0
    %v165 = vsel %vm161, 1, 0
    %v166 = vsel %vm162, 1, 0
    %v167 = vsel %vm163, 1, 0
    %v168 = vsel %vm164, 1, 0
    %169 = vset.pattern.permute.xlu0 0
    %170 = vperm.xlu0 %169, %v165
    %v171 = vpop.permute.xlu0 %170
    %172 = vset.pattern.permute.xlu0 0
    %173 = vperm.xlu0 %172, %v166
    %v174 = vpop.permute.xlu0 %173
    %175 = vset.pattern.permute.xlu0 0
    %176 = vperm.xlu0 %175, %v167
    %v177 = vpop.permute.xlu0 %176
    %178 = vset.pattern.permute.xlu0 0
    %179 = vperm.xlu0 %178, %v168
    %v180 = vpop.permute.xlu0 %179
    %vm181 = vcmp.eq.s32.totalorder %v171, 1
    %vm182 = vcmp.eq.s32.totalorder %v174, 1
    %vm183 = vcmp.eq.s32.totalorder %v177, 1
    %vm184 = vcmp.eq.s32.totalorder %v180, 1
    %v185 = vlaneseq
    %v186 = vshrl.u32 %v185, 7
    %v187 = vsub.s32 0, %v186
    %v188 = vrot.slane %v160, %v187
    %v189 = vsel %vm181, %v188, 0.0
    %v190 = vsel %vm182, %v188, 0.0
    %v191 = vsel %vm183, %v188, 0.0
    %v192 = vsel %vm184, %v188, 0.0
    %vm193 = vcmp.eq.s32.totalorder %v117, 1
    %vm194 = vcmp.eq.s32.totalorder %v118, 1
    %vm195 = vcmp.eq.s32.totalorder %v119, 1
    %vm196 = vcmp.eq.s32.totalorder %v120, 1
    %v197 = vsel %vm193, 1, 0
    %v198 = vsel %vm194, 1, 0
    %v199 = vsel %vm195, 1, 0
    %v200 = vsel %vm196, 1, 0
    %201 = vset.pattern.permute.xlu0 0
    %202 = vperm.xlu0 %201, %v197
    %v203 = vpop.permute.xlu0 %202
    %204 = vset.pattern.permute.xlu0 0
    %205 = vperm.xlu0 %204, %v198
    %v206 = vpop.permute.xlu0 %205
    %207 = vset.pattern.permute.xlu0 0
    %208 = vperm.xlu0 %207, %v199
    %v209 = vpop.permute.xlu0 %208
    %210 = vset.pattern.permute.xlu0 0
    %211 = vperm.xlu0 %210, %v200
    %v212 = vpop.permute.xlu0 %211
    %vm213 = vcmp.eq.s32.totalorder %v203, 1
    %vm214 = vcmp.eq.s32.totalorder %v206, 1
    %vm215 = vcmp.eq.s32.totalorder %v209, 1
    %vm216 = vcmp.eq.s32.totalorder %v212, 1
    %v217 = vlaneseq
    %v218 = vshrl.u32 %v217, 7
    %v219 = vsub.s32 1, %v218
    %v220 = vrot.slane %v160, %v219
    %v221 = vsel %vm213, %v220, %v189
    %v222 = vsel %vm214, %v220, %v190
    %v223 = vsel %vm215, %v220, %v191
    %v224 = vsel %vm216, %v220, %v192
    %vm225 = vcmp.eq.s32.totalorder %v117, 2
    %vm226 = vcmp.eq.s32.totalorder %v118, 2
    %vm227 = vcmp.eq.s32.totalorder %v119, 2
    %vm228 = vcmp.eq.s32.totalorder %v120, 2
    %v229 = vsel %vm225, 1, 0
    %v230 = vsel %vm226, 1, 0
    %v231 = vsel %vm227, 1, 0
    %v232 = vsel %vm228, 1, 0
    %233 = vset.pattern.permute.xlu0 0
    %234 = vperm.xlu0 %233, %v229
    %v235 = vpop.permute.xlu0 %234
    %236 = vset.pattern.permute.xlu0 0
    %237 = vperm.xlu0 %236, %v230
    %v238 = vpop.permute.xlu0 %237
    %239 = vset.pattern.permute.xlu0 0
    %240 = vperm.xlu0 %239, %v231
    %v241 = vpop.permute.xlu0 %240
    %242 = vset.pattern.permute.xlu0 0
    %243 = vperm.xlu0 %242, %v232
    %v244 = vpop.permute.xlu0 %243
    %vm245 = vcmp.eq.s32.totalorder %v235, 1
    %vm246 = vcmp.eq.s32.totalorder %v238, 1
    %vm247 = vcmp.eq.s32.totalorder %v241, 1
    %vm248 = vcmp.eq.s32.totalorder %v244, 1
    %v249 = vlaneseq
    %v250 = vshrl.u32 %v249, 7
    %v251 = vsub.s32 2, %v250
    %v252 = vrot.slane %v160, %v251
    %v253 = vsel %vm245, %v252, %v221
    %v254 = vsel %vm246, %v252, %v222
    %v255 = vsel %vm247, %v252, %v223
    %v256 = vsel %vm248, %v252, %v224
    %v269 = vunpack.c.l.b16 %v148
    %v270 = vunpack.c.l.b16 %v149
    %v271 = vunpack.c.l.b16 %v150
    %v272 = vunpack.c.l.b16 %v151
    %v273 = vunpack.c.l.b16 %v152
    %v274 = vunpack.c.l.b16 %v153
    %v275 = vunpack.c.l.b16 %v154
    %v276 = vunpack.c.l.b16 %v155
    %v277 = vunpack.c.l.b16 %v156
    %v278 = vunpack.c.l.b16 %v157
    %v279 = vunpack.c.l.b16 %v158
    %v280 = vunpack.c.l.b16 %v159
    %v281 = vpack.c.b16 %v270, %v269
    %v282 = vpack.c.b16 %v272, %v271
    %v283 = vpack.c.b16 %v274, %v273
    %v284 = vpack.c.b16 %v276, %v275
    %v285 = vpack.c.b16 %v278, %v277
    %v286 = vpack.c.b16 %v280, %v279
    %vm293 = vcmask 785408
    %v295 = vsel %vm293, %v146, 0
    %v298 = vsel %vm293, %v147, 0
    %300 = vmatprep.subr.bf16.mxu0 0
    %301 = vmatpush1.bf16.msra.mxu0 0
    %302 = vmatprep.subr.bf16.mxu0 0
    %303 = vmatpush1.bf16.msra.mxu0 0
    %304 = vmatprep.subr.bf16.mxu0 0
    %305 = vmatpush1.bf16.msra.mxu0 %v286
    %306 = vmatprep.subr.bf16.mxu0 0
    %307 = vmatpush1.bf16.msra.mxu0 %v285
    %308 = vmatprep.subr.bf16.mxu0 0
    %309 = vmatpush1.bf16.msra.mxu0 %v284
    %310 = vmatprep.subr.bf16.mxu0 0
    %311 = vmatpush1.bf16.msra.mxu0 %v283
    %312 = vmatprep.subr.bf16.mxu0 0
    %313 = vmatpush1.bf16.msra.mxu0 %v282
    %314 = vmatprep.subr.bf16.mxu0 0
    %315 = vmatpush1.bf16.msra.mxu0 %v281
    %316 = vmatprep.subr.bf16.mxu0 0
    %317 = vmatpush2.bf16.msra.mxu0 0
    %318 = vmatprep.subr.bf16.mxu0 0
    %319 = vmatpush2.bf16.msra.mxu0 0
    %320 = vmatprep.subr.bf16.mxu0 0
    %321 = vmatpush2.bf16.msra.mxu0 0
    %322 = vmatprep.subr.bf16.mxu0 0
    %323 = vmatpush2.bf16.msra.mxu0 0
    %324 = vmatprep.subr.bf16.mxu0 0
    %325 = vmatpush2.bf16.msra.mxu0 0
    %326 = vmatprep.subr.bf16.mxu0 0
    %327 = vmatpush2.bf16.msra.mxu0 0
    %328 = vmatprep.subr.bf16.mxu0 0
    %329 = vmatpush2.bf16.msra.mxu0 0
    %330 = vmatprep.subr.bf16.mxu0 0
    %331 = vmatpush2.bf16.msra.mxu0 0
    %332 = vmatprep.mubr.bf16.mxu0 0
    %333 = vmatmul.mubr.bf16.gmra.mxu0 %v295
    %v334 = vpop.f32.mrf.mxu0
    %v335 = vadd.f32 %v253, %v334
    %v336 = vpop.f32.mrf.mxu0
    %v337 = vpop.f32.mrf.mxu0
    %v338 = vadd.f32 %v254, %v337
    %v339 = vpop.f32.mrf.mxu0
    %340 = vmatprep.mubr.bf16.mxu0 0
    %341 = vmatmul.mubr.bf16.gmra.mxu0 %v298
    %v342 = vpop.f32.mrf.mxu0
    %v343 = vadd.f32 %v255, %v342
    %v344 = vpop.f32.mrf.mxu0
    %v345 = vpop.f32.mrf.mxu0
    %v346 = vadd.f32 %v256, %v345
    %v347 = vpop.f32.mrf.mxu0
    %348 = vdwg.mxu0
    %349 = vst [vmem:[#allocation2] sm:$0xff] %v335
    %350 = vst [vmem:[#allocation2 + $0x8] sm:$0xff] %v338
    %351 = vst [vmem:[#allocation2 + $0x10] sm:$0xff] %v343
    %352 = vst [vmem:[#allocation2 + $0x18] sm:$0xff] %v346
    // Predicated region
    $region30: #{tpu_custom_call.1} parent=1 // pred_check
      _
    $region31: #{tpu_custom_call.1} parent=1 // pred_check_branch
      %354 = sbr.rel (0) target = $region33
    $region32: #{tpu_custom_call.1} parent=1 // pred_region
      %s356 = ssub.s32 512, 512
      %357 = vsyncadd [#allocation3], %s356
      %s358 = sshll.u32 [#allocation2], 4
      %s359 = int_to_ptr.vmem [resolvable:$true] %s358
      %364 = dma.vmem_to_hbm [thread:$0]  %s359, 512, %s7, [#allocation3], 128, 128, 8
    $region33: #{tpu_custom_call.1} parent=1 // pred_fallthru
      _
    // Predicated region
    $region34: #{tpu_custom_call.1} parent=1 // pred_check
      _
    $region35: #{tpu_custom_call.1} parent=1 // pred_check_branch
      %366 = sbr.rel (0) target = $region37
    $region36: #{tpu_custom_call.1} parent=1 // pred_region
      %367 = dma.done [#allocation3], 512
    $region37: #{tpu_custom_call.1} parent=1 // pred_fallthru
      _
    %368 = vsyncpa [#allocation3], 1

</llo_original>
